<compile_context>
chip_gen: v7x
topology: tpu7x:2x2x1
jax: 0.10.0
libtpu: 0.0.40
codegen_flags: <defaults>
</compile_context>

<pallas_src>
import jax
import jax.numpy as jnp
import numpy as np
from jax.experimental import pallas as pl
from jax.experimental.pallas import tpu as pltpu


def _double_conv_kernel(x_ref, w1_ref, s1_ref, sh1_ref,
                        w2_ref, s2_ref, sh2_ref, o_ref,
                        xpad1_ref, xpad2_ref):
    # x_ref   : (NB, H, W*Cin)       bf16, NB images per grid step, W on lanes
    # w1_ref  : (3, W*Cin, W*Cmid)   bf16 banded 3x3 weights, one slab per dy
    # s1_ref  : (1, W*Cmid)          f32 BN scale (tiled over W)
    # sh1_ref : (1, W*Cmid)          f32 BN shift (conv bias folded, tiled)
    # w2_ref  : (3, W*Cmid, W*Cout)  bf16
    # s2_ref  : (1, W*Cout)          f32
    # sh2_ref : (1, W*Cout)          f32
    # o_ref   : (NB, H, W*Cout)      f32, lane-dense output slab
    # xpad1_ref / xpad2_ref : (NB, H+2, W*C) f32 VMEM scratch (zero-padded rows)
    nb, h = x_ref.shape[0], x_ref.shape[1]
    wc_mid = w1_ref.shape[2]
    wc_out = w2_ref.shape[2]

    def conv_bn_relu(xpad_ref, w_ref, s_ref, sh_ref):
        # conv3x3(padding=1) == sum over 3 row taps dy of
        # (row-shifted activation) @ (banded weight); dx taps + channel mixing
        # live inside the band, H padding is the two zero rows in the scratch.
        k = xpad_ref.shape[2]
        wc_o = w_ref.shape[2]
        acc = jnp.zeros((nb * h, wc_o), jnp.float32)
        for dy in range(3):                                  # static unroll
            lhs = xpad_ref[:, dy:dy + h, :].reshape(nb * h, k)
            acc = acc + jnp.dot(lhs.astype(jnp.bfloat16), w_ref[dy],
                                preferred_element_type=jnp.float32)
        # fused conv-bias + BatchNorm (inference) + ReLU, in f32
        return jnp.maximum(acc * s_ref[...] + sh_ref[...], 0.0)

    # ---- stage 1: zero-pad the input along H into VMEM scratch --------------
    zrow1 = jnp.zeros((nb, 1, x_ref.shape[2]), xpad1_ref.dtype)
    xpad1_ref[:, 0:1, :] = zrow1
    xpad1_ref[:, h + 1:h + 2, :] = zrow1
    xpad1_ref[:, 1:h + 1, :] = x_ref[...].astype(xpad1_ref.dtype)
    y1 = conv_bn_relu(xpad1_ref, w1_ref, s1_ref, sh1_ref)   # (NB*H, W*Cmid) f32

    # ---- stage 2: stage-1 activation stays in VMEM (padded scratch) ---------
    zrow2 = jnp.zeros((nb, 1, wc_mid), xpad2_ref.dtype)
    xpad2_ref[:, 0:1, :] = zrow2
    xpad2_ref[:, h + 1:h + 2, :] = zrow2
    xpad2_ref[:, 1:h + 1, :] = y1.reshape(nb, h, wc_mid)
    y2 = conv_bn_relu(xpad2_ref, w2_ref, s2_ref, sh2_ref)   # (NB*H, W*Cout) f32

    o_ref[...] = y2.reshape(nb, h, wc_out).astype(o_ref.dtype)


def _banded_conv_weight(w_conv, width):
    """(Cout, Cin, 3, 3) conv weight -> (3, W*Cin, W*Cout) banded matrices, bf16.

    big[dy, (wi+dx-1)*Cin + ci, wi*Cout + co] = w[co, ci, dy, dx]
    so out[h, wi*Cout+co] = sum_dy (padded_row[h+dy] @ big[dy]) reproduces
    conv2d(k=3, padding=1); dx taps outside [0, W) are absent from the band
    (== zero padding along W).
    """
    w = np.asarray(w_conv, np.float32)
    c_out, c_in = w.shape[0], w.shape[1]
    big = np.zeros((3, width * c_in, width * c_out), np.float32)
    for dy in range(3):
        for dx in range(3):
            blk = w[:, :, dy, dx].T                          # (Cin, Cout)
            for wi in range(width):
                sw = wi + dx - 1
                if 0 <= sw < width:
                    big[dy, sw * c_in:(sw + 1) * c_in,
                        wi * c_out:(wi + 1) * c_out] = blk
    return jnp.asarray(big, jnp.bfloat16)


def _fold_bn_tiled(bias, gamma, beta, mean, var, width, eps=1e-5):
    # Fold conv bias + inference BatchNorm into scale/shift, tiled over W so it
    # broadcasts directly against the (M, W*C) folded activation. Kept in f32.
    # TODO(synk): BatchNorm is folded in inference (running-stats) mode;
    # training-mode batch-statistic computation/update is not implemented.
    scale = gamma / jnp.sqrt(var + eps)
    shift = (bias - mean) * scale + beta
    return (jnp.tile(scale, width)[None, :].astype(jnp.float32),
            jnp.tile(shift, width)[None, :].astype(jnp.float32))


def _pick_batch_block(n, h, target_rows=256):
    # M = NB*H rows per matmul; aim for ~256 (v6e/v7x MXU) but keep >= 2
    # parallel grid steps so both v7x TensorCores get work.
    cap = max(1, min(max(1, n // 2), max(1, target_rows // h)))
    for nb in range(cap, 0, -1):
        if n % nb == 0:
            return nb
    return 1


def double_conv_nhwc(x_slab, params, width):
    """x_slab: (N, H, W*Cin) slab (W folded onto lanes). Returns (N, H, W*Cout) f32."""
    n, h, wc_in = x_slab.shape
    (w1, b1, g1, be1, m1, v1), (w2, b2, g2, be2, m2, v2) = params
    c_in, c_mid, c_out = w1.shape[1], w1.shape[0], w2.shape[0]
    assert wc_in == width * c_in
    wc_mid, wc_out = width * c_mid, width * c_out

    x = x_slab.astype(jnp.bfloat16)                      # bf16 activations
    w1b = _banded_conv_weight(w1, width)                 # (3, W*Cin,  W*Cmid) bf16
    w2b = _banded_conv_weight(w2, width)                 # (3, W*Cmid, W*Cout) bf16
    s1, sh1 = _fold_bn_tiled(b1, g1, be1, m1, v1, width)
    s2, sh2 = _fold_bn_tiled(b2, g2, be2, m2, v2, width)

    nb = _pick_batch_block(n, h)
    grid = (n // nb,)

    # VMEM budget from actual block/scratch sizes; stay well under v7x's 64 MiB.
    bytes_needed = (
        2 * nb * h * wc_in * 2                 # x block (double-buffered, bf16)
        + 2 * nb * h * wc_out * 4              # out block (double-buffered, f32)
        + 3 * wc_in * wc_mid * 2               # w1 band (single-buffered, bf16)
        + 3 * wc_mid * wc_out * 2              # w2 band (single-buffered, bf16)
        + 2 * (wc_mid + wc_out) * 4            # scale / shift
        + nb * (h + 2) * (wc_in + wc_mid) * 4  # padded-activation f32 scratch
    )
    vmem_limit = int(min(48 * 1024 * 1024, max(8 * 1024 * 1024, 4 * bytes_needed)))

    resident = dict(pipeline_mode=pl.Buffered(1))   # grid-invariant: single buffer

    out = pl.pallas_call(
        _double_conv_kernel,
        out_shape=jax.ShapeDtypeStruct((n, h, wc_out), jnp.float32),
        grid_spec=pltpu.PrefetchScalarGridSpec(
            num_scalar_prefetch=0,
            grid=grid,
            in_specs=[
                pl.BlockSpec((nb, h, wc_in), lambda i: (i, 0, 0)),
                pl.BlockSpec((3, wc_in, wc_mid), lambda i: (0, 0, 0), **resident),
                pl.BlockSpec((1, wc_mid), lambda i: (0, 0), **resident),
                pl.BlockSpec((1, wc_mid), lambda i: (0, 0), **resident),
                pl.BlockSpec((3, wc_mid, wc_out), lambda i: (0, 0, 0), **resident),
                pl.BlockSpec((1, wc_out), lambda i: (0, 0), **resident),
                pl.BlockSpec((1, wc_out), lambda i: (0, 0), **resident),
            ],
            out_specs=pl.BlockSpec((nb, h, wc_out), lambda i: (i, 0, 0)),
            scratch_shapes=[
                pltpu.VMEM((nb, h + 2, wc_in), jnp.float32),
                pltpu.VMEM((nb, h + 2, wc_mid), jnp.float32),
            ],
        ),
        compiler_params=pltpu.CompilerParams(
            dimension_semantics=("parallel",),
            vmem_limit_bytes=vmem_limit,
        ),
    )(x, w1b, s1, sh1, w2b, s2, sh2)
    return out


def double_conv(x_nchw, params):
    # PyTorch-compatible NCHW interface. The transpose/reshape below is layout
    # plumbing only; in an NHWC pipeline call double_conv_nhwc directly with
    # (N, H, W*C) slabs to avoid these extra XLA passes (review item).
    n, c_in, h, width = x_nchw.shape
    c_out = params[1][0].shape[0]
    x = jnp.transpose(x_nchw, (0, 2, 3, 1)).reshape(n, h, width * c_in)
    out = double_conv_nhwc(x, params, width)
    return jnp.transpose(out.reshape(n, h, width, c_out), (0, 3, 1, 2))


def _make_params(key, c_in, c_mid, c_out):
    ks = jax.random.split(key, 12)

    def conv_init(k, co, ci):
        fan_in = ci * 9
        bound = 1.0 / jnp.sqrt(fan_in)
        kw, kb = jax.random.split(k)
        w = jax.random.uniform(kw, (co, ci, 3, 3), jnp.float32, -bound, bound)
        b = jax.random.uniform(kb, (co,), jnp.float32, -bound, bound)
        return w, b

    w1, b1 = conv_init(ks[0], c_mid, c_in)
    w2, b2 = conv_init(ks[1], c_out, c_mid)
    # BatchNorm params (inference / running stats), deterministic + non-trivial.
    g1 = 1.0 + 0.1 * jax.random.normal(ks[2], (c_mid,), jnp.float32)
    be1 = 0.1 * jax.random.normal(ks[3], (c_mid,), jnp.float32)
    m1 = 0.05 * jax.random.normal(ks[4], (c_mid,), jnp.float32)
    v1 = 1.0 + 0.1 * jax.random.uniform(ks[5], (c_mid,), jnp.float32)
    g2 = 1.0 + 0.1 * jax.random.normal(ks[6], (c_out,), jnp.float32)
    be2 = 0.1 * jax.random.normal(ks[7], (c_out,), jnp.float32)
    m2 = 0.05 * jax.random.normal(ks[8], (c_out,), jnp.float32)
    v2 = 1.0 + 0.1 * jax.random.uniform(ks[9], (c_out,), jnp.float32)
    return ((w1, b1, g1, be1, m1, v1), (w2, b2, g2, be2, m2, v2))


def _reference(x_nchw, params):
    # Pure-JAX f32 reference (lax conv, NCHW) for the correctness cross-check.
    y = x_nchw.astype(jnp.float32)
    for (w, b, g, be, m, v) in params:
        y = jax.lax.conv_general_dilated(
            y, w, window_strides=(1, 1), padding=((1, 1), (1, 1)),
            dimension_numbers=("NCHW", "OIHW", "NCHW"))
        y = y + b[None, :, None, None]
        y = g[None, :, None, None] * (y - m[None, :, None, None]) / \
            jnp.sqrt(v[None, :, None, None] + 1e-5) + be[None, :, None, None]
        y = jnp.maximum(y, 0.0)
    return y


if __name__ == "__main__":
    # NOTE: BatchNorm is implemented in inference (running-stats) mode.
    N, C_IN, C_OUT, H, W = 2, 4, 8, 16, 16
    key = jax.random.PRNGKey(0)
    kx, kp = jax.random.split(key)
    x = jax.random.normal(kx, (N, C_IN, H, W), jnp.float32)
    params = _make_params(kp, C_IN, C_OUT, C_OUT)   # mid_channels defaults to out

    out = jax.block_until_ready(double_conv(x, params))
    ref = jax.block_until_ready(_reference(x, params))

    assert out.shape == (N, C_OUT, H, W)
    # bf16 matmul inputs with f32 accumulation: tolerance relaxed vs. pure f32
    # (measured error is ~1e-3 typical / <1e-2 max at these shapes).
    err = float(jnp.max(jnp.abs(out - ref)))
    assert jnp.allclose(out, ref, atol=2e-2, rtol=2e-2), err
    print("KERNEL_OK")
</pallas_src>

<mosaic_0001>
module attributes {stable_mosaic.version = 11 : i64} {
  func.func @_double_conv_kernel(%arg0: i32, %arg1: memref<1x16x64xbf16, #tpu.memory_space<vmem>>, %arg2: memref<3x64x128xbf16, #tpu.memory_space<vmem>>, %arg3: memref<1x128xf32, #tpu.memory_space<vmem>>, %arg4: memref<1x128xf32, #tpu.memory_space<vmem>>, %arg5: memref<3x128x128xbf16, #tpu.memory_space<vmem>>, %arg6: memref<1x128xf32, #tpu.memory_space<vmem>>, %arg7: memref<1x128xf32, #tpu.memory_space<vmem>>, %arg8: memref<1x16x128xf32, #tpu.memory_space<vmem>>, %arg9: memref<1x18x64xf32, #tpu.memory_space<vmem>>, %arg10: memref<1x18x128xf32, #tpu.memory_space<vmem>>) attributes {dimension_semantics = [#tpu.dimension_semantics<parallel>], iteration_bounds = array<i64: 2>, scalar_prefetch = 0 : i64, scratch_operands = 2 : i64, tpu.core_type = #tpu.core_type<tc>, window_params = [{transform_indices = @transform_0, window_bounds = array<i64: 1, 16, 64>}, {pipeline_mode = #tpu.pipeline_mode<synchronous>, transform_indices = @transform_1, window_bounds = array<i64: 3, 64, 128>}, {pipeline_mode = #tpu.pipeline_mode<synchronous>, transform_indices = @transform_2, window_bounds = array<i64: 1, 128>}, {pipeline_mode = #tpu.pipeline_mode<synchronous>, transform_indices = @transform_3, window_bounds = array<i64: 1, 128>}, {pipeline_mode = #tpu.pipeline_mode<synchronous>, transform_indices = @transform_4, window_bounds = array<i64: 3, 128, 128>}, {pipeline_mode = #tpu.pipeline_mode<synchronous>, transform_indices = @transform_5, window_bounds = array<i64: 1, 128>}, {pipeline_mode = #tpu.pipeline_mode<synchronous>, transform_indices = @transform_6, window_bounds = array<i64: 1, 128>}, {transform_indices = @transform_7, window_bounds = array<i64: 1, 16, 128>}]} {
    %cst = arith.constant 0.000000e+00 : f32
    %0 = vector.broadcast %cst : f32 to vector<1x1x64xf32>
    %c0 = arith.constant 0 : index
    %c0_0 = arith.constant 0 : index
    %c0_1 = arith.constant 0 : index
    %1 = vector.load %arg9[%c0, %c0_0, %c0_1] : memref<1x18x64xf32, #tpu.memory_space<vmem>>, vector<1x1x64xf32>
    tpu.vector_store %arg9[%c0, %c0_0, %c0_1], %0 {strides = array<i32>} : memref<1x18x64xf32, #tpu.memory_space<vmem>>, vector<1x1x64xf32>,
    %c0_2 = arith.constant 0 : index
    %c17 = arith.constant 17 : index
    %c0_3 = arith.constant 0 : index
    %2 = vector.load %arg9[%c0_2, %c17, %c0_3] : memref<1x18x64xf32, #tpu.memory_space<vmem>>, vector<1x1x64xf32>
    tpu.vector_store %arg9[%c0_2, %c17, %c0_3], %0 {strides = array<i32>} : memref<1x18x64xf32, #tpu.memory_space<vmem>>, vector<1x1x64xf32>,
    %c0_4 = arith.constant 0 : index
    %c0_5 = arith.constant 0 : index
    %c0_6 = arith.constant 0 : index
    %3 = vector.load %arg1[%c0_4, %c0_5, %c0_6] : memref<1x16x64xbf16, #tpu.memory_space<vmem>>, vector<1x16x64xbf16>
    %4 = arith.extf %3 : vector<1x16x64xbf16> to vector<1x16x64xf32>
    %c0_7 = arith.constant 0 : index
    %c1 = arith.constant 1 : index
    %c0_8 = arith.constant 0 : index
    %5 = vector.load %arg9[%c0_7, %c1, %c0_8] : memref<1x18x64xf32, #tpu.memory_space<vmem>>, vector<1x16x64xf32>
    tpu.vector_store %arg9[%c0_7, %c1, %c0_8], %4 {strides = array<i32>} : memref<1x18x64xf32, #tpu.memory_space<vmem>>, vector<1x16x64xf32>,
    %cst_9 = arith.constant 0.000000e+00 : f32
    %6 = vector.broadcast %cst_9 : f32 to vector<16x128xf32>
    %c0_10 = arith.constant 0 : index
    %c0_11 = arith.constant 0 : index
    %c0_12 = arith.constant 0 : index
    %7 = vector.load %arg9[%c0_10, %c0_11, %c0_12] : memref<1x18x64xf32, #tpu.memory_space<vmem>>, vector<1x16x64xf32>
    %8 = vector.shape_cast %7 : vector<1x16x64xf32> to vector<16x64xf32>
    %9 = arith.truncf %8 : vector<16x64xf32> to vector<16x64xbf16>
    %c0_13 = arith.constant 0 : index
    %c0_14 = arith.constant 0 : index
    %c0_15 = arith.constant 0 : index
    %10 = vector.load %arg2[%c0_13, %c0_14, %c0_15] : memref<3x64x128xbf16, #tpu.memory_space<vmem>>, vector<1x64x128xbf16>
    %11 = vector.shape_cast %10 : vector<1x64x128xbf16> to vector<64x128xbf16>
    %cst_16 = arith.constant dense<0.000000e+00> : vector<16x128xf32>
    %12 = tpu.matmul %9, %11, %cst_16 {dimension_numbers = #tpu.dot_dimension_numbers<[1], [0], [0], [1], [0, 0, 1, 1], [], []>} : vector<16x64xbf16>, vector<64x128xbf16>, vector<16x128xf32> -> vector<16x128xf32>
    %13 = arith.addf %6, %12 : vector<16x128xf32>
    %c0_17 = arith.constant 0 : index
    %c1_18 = arith.constant 1 : index
    %c0_19 = arith.constant 0 : index
    %14 = vector.load %arg9[%c0_17, %c1_18, %c0_19] : memref<1x18x64xf32, #tpu.memory_space<vmem>>, vector<1x16x64xf32>
    %15 = vector.shape_cast %14 : vector<1x16x64xf32> to vector<16x64xf32>
    %16 = arith.truncf %15 : vector<16x64xf32> to vector<16x64xbf16>
    %c1_20 = arith.constant 1 : index
    %c0_21 = arith.constant 0 : index
    %c0_22 = arith.constant 0 : index
    %17 = vector.load %arg2[%c1_20, %c0_21, %c0_22] : memref<3x64x128xbf16, #tpu.memory_space<vmem>>, vector<1x64x128xbf16>
    %18 = vector.shape_cast %17 : vector<1x64x128xbf16> to vector<64x128xbf16>
    %cst_23 = arith.constant dense<0.000000e+00> : vector<16x128xf32>
    %19 = tpu.matmul %16, %18, %cst_23 {dimension_numbers = #tpu.dot_dimension_numbers<[1], [0], [0], [1], [0, 0, 1, 1], [], []>} : vector<16x64xbf16>, vector<64x128xbf16>, vector<16x128xf32> -> vector<16x128xf32>
    %20 = arith.addf %13, %19 : vector<16x128xf32>
    %c0_24 = arith.constant 0 : index
    %c2 = arith.constant 2 : index
    %c0_25 = arith.constant 0 : index
    %21 = vector.load %arg9[%c0_24, %c2, %c0_25] : memref<1x18x64xf32, #tpu.memory_space<vmem>>, vector<1x16x64xf32>
    %22 = vector.shape_cast %21 : vector<1x16x64xf32> to vector<16x64xf32>
    %23 = arith.truncf %22 : vector<16x64xf32> to vector<16x64xbf16>
    %c2_26 = arith.constant 2 : index
    %c0_27 = arith.constant 0 : index
    %c0_28 = arith.constant 0 : index
    %24 = vector.load %arg2[%c2_26, %c0_27, %c0_28] : memref<3x64x128xbf16, #tpu.memory_space<vmem>>, vector<1x64x128xbf16>
    %25 = vector.shape_cast %24 : vector<1x64x128xbf16> to vector<64x128xbf16>
    %cst_29 = arith.constant dense<0.000000e+00> : vector<16x128xf32>
    %26 = tpu.matmul %23, %25, %cst_29 {dimension_numbers = #tpu.dot_dimension_numbers<[1], [0], [0], [1], [0, 0, 1, 1], [], []>} : vector<16x64xbf16>, vector<64x128xbf16>, vector<16x128xf32> -> vector<16x128xf32>
    %27 = arith.addf %20, %26 : vector<16x128xf32>
    %c0_30 = arith.constant 0 : index
    %c0_31 = arith.constant 0 : index
    %28 = vector.load %arg3[%c0_30, %c0_31] : memref<1x128xf32, #tpu.memory_space<vmem>>, vector<1x128xf32>
    %29 = vector.broadcast %28 : vector<1x128xf32> to vector<16x128xf32>
    %30 = arith.mulf %27, %29 : vector<16x128xf32>
    %c0_32 = arith.constant 0 : index
    %c0_33 = arith.constant 0 : index
    %31 = vector.load %arg4[%c0_32, %c0_33] : memref<1x128xf32, #tpu.memory_space<vmem>>, vector<1x128xf32>
    %32 = vector.broadcast %31 : vector<1x128xf32> to vector<16x128xf32>
    %33 = arith.addf %30, %32 : vector<16x128xf32>
    %cst_34 = arith.constant 0.000000e+00 : f32
    %34 = vector.broadcast %cst_34 : f32 to vector<16x128xf32>
    %35 = arith.maximumf %33, %34 : vector<16x128xf32>
    %cst_35 = arith.constant 0.000000e+00 : f32
    %36 = vector.broadcast %cst_35 : f32 to vector<1x1x128xf32>
    %c0_36 = arith.constant 0 : index
    %c0_37 = arith.constant 0 : index
    %c0_38 = arith.constant 0 : index
    %37 = vector.load %arg10[%c0_36, %c0_37, %c0_38] : memref<1x18x128xf32, #tpu.memory_space<vmem>>, vector<1x1x128xf32>
    tpu.vector_store %arg10[%c0_36, %c0_37, %c0_38], %36 {strides = array<i32>} : memref<1x18x128xf32, #tpu.memory_space<vmem>>, vector<1x1x128xf32>,
    %c0_39 = arith.constant 0 : index
    %c17_40 = arith.constant 17 : index
    %c0_41 = arith.constant 0 : index
    %38 = vector.load %arg10[%c0_39, %c17_40, %c0_41] : memref<1x18x128xf32, #tpu.memory_space<vmem>>, vector<1x1x128xf32>
    tpu.vector_store %arg10[%c0_39, %c17_40, %c0_41], %36 {strides = array<i32>} : memref<1x18x128xf32, #tpu.memory_space<vmem>>, vector<1x1x128xf32>,
    %39 = vector.shape_cast %35 : vector<16x128xf32> to vector<1x16x128xf32>
    %c0_42 = arith.constant 0 : index
    %c1_43 = arith.constant 1 : index
    %c0_44 = arith.constant 0 : index
    %40 = vector.load %arg10[%c0_42, %c1_43, %c0_44] : memref<1x18x128xf32, #tpu.memory_space<vmem>>, vector<1x16x128xf32>
    tpu.vector_store %arg10[%c0_42, %c1_43, %c0_44], %39 {strides = array<i32>} : memref<1x18x128xf32, #tpu.memory_space<vmem>>, vector<1x16x128xf32>,
    %cst_45 = arith.constant 0.000000e+00 : f32
    %41 = vector.broadcast %cst_45 : f32 to vector<16x128xf32>
    %c0_46 = arith.constant 0 : index
    %c0_47 = arith.constant 0 : index
    %c0_48 = arith.constant 0 : index
    %42 = vector.load %arg10[%c0_46, %c0_47, %c0_48] : memref<1x18x128xf32, #tpu.memory_space<vmem>>, vector<1x16x128xf32>
    %43 = vector.shape_cast %42 : vector<1x16x128xf32> to vector<16x128xf32>
    %44 = arith.truncf %43 : vector<16x128xf32> to vector<16x128xbf16>
    %c0_49 = arith.constant 0 : index
    %c0_50 = arith.constant 0 : index
    %c0_51 = arith.constant 0 : index
    %45 = vector.load %arg5[%c0_49, %c0_50, %c0_51] : memref<3x128x128xbf16, #tpu.memory_space<vmem>>, vector<1x128x128xbf16>
    %46 = vector.shape_cast %45 : vector<1x128x128xbf16> to vector<128x128xbf16>
    %cst_52 = arith.constant dense<0.000000e+00> : vector<16x128xf32>
    %47 = tpu.matmul %44, %46, %cst_52 {dimension_numbers = #tpu.dot_dimension_numbers<[1], [0], [0], [1], [0, 0, 1, 1], [], []>} : vector<16x128xbf16>, vector<128x128xbf16>, vector<16x128xf32> -> vector<16x128xf32>
    %48 = arith.addf %41, %47 : vector<16x128xf32>
    %c0_53 = arith.constant 0 : index
    %c1_54 = arith.constant 1 : index
    %c0_55 = arith.constant 0 : index
    %49 = vector.load %arg10[%c0_53, %c1_54, %c0_55] : memref<1x18x128xf32, #tpu.memory_space<vmem>>, vector<1x16x128xf32>
    %50 = vector.shape_cast %49 : vector<1x16x128xf32> to vector<16x128xf32>
    %51 = arith.truncf %50 : vector<16x128xf32> to vector<16x128xbf16>
    %c1_56 = arith.constant 1 : index
    %c0_57 = arith.constant 0 : index
    %c0_58 = arith.constant 0 : index
    %52 = vector.load %arg5[%c1_56, %c0_57, %c0_58] : memref<3x128x128xbf16, #tpu.memory_space<vmem>>, vector<1x128x128xbf16>
    %53 = vector.shape_cast %52 : vector<1x128x128xbf16> to vector<128x128xbf16>
    %cst_59 = arith.constant dense<0.000000e+00> : vector<16x128xf32>
    %54 = tpu.matmul %51, %53, %cst_59 {dimension_numbers = #tpu.dot_dimension_numbers<[1], [0], [0], [1], [0, 0, 1, 1], [], []>} : vector<16x128xbf16>, vector<128x128xbf16>, vector<16x128xf32> -> vector<16x128xf32>
    %55 = arith.addf %48, %54 : vector<16x128xf32>
    %c0_60 = arith.constant 0 : index
    %c2_61 = arith.constant 2 : index
    %c0_62 = arith.constant 0 : index
    %56 = vector.load %arg10[%c0_60, %c2_61, %c0_62] : memref<1x18x128xf32, #tpu.memory_space<vmem>>, vector<1x16x128xf32>
    %57 = vector.shape_cast %56 : vector<1x16x128xf32> to vector<16x128xf32>
    %58 = arith.truncf %57 : vector<16x128xf32> to vector<16x128xbf16>
    %c2_63 = arith.constant 2 : index
    %c0_64 = arith.constant 0 : index
    %c0_65 = arith.constant 0 : index
    %59 = vector.load %arg5[%c2_63, %c0_64, %c0_65] : memref<3x128x128xbf16, #tpu.memory_space<vmem>>, vector<1x128x128xbf16>
    %60 = vector.shape_cast %59 : vector<1x128x128xbf16> to vector<128x128xbf16>
    %cst_66 = arith.constant dense<0.000000e+00> : vector<16x128xf32>
    %61 = tpu.matmul %58, %60, %cst_66 {dimension_numbers = #tpu.dot_dimension_numbers<[1], [0], [0], [1], [0, 0, 1, 1], [], []>} : vector<16x128xbf16>, vector<128x128xbf16>, vector<16x128xf32> -> vector<16x128xf32>
    %62 = arith.addf %55, %61 : vector<16x128xf32>
    %c0_67 = arith.constant 0 : index
    %c0_68 = arith.constant 0 : index
    %63 = vector.load %arg6[%c0_67, %c0_68] : memref<1x128xf32, #tpu.memory_space<vmem>>, vector<1x128xf32>
    %64 = vector.broadcast %63 : vector<1x128xf32> to vector<16x128xf32>
    %65 = arith.mulf %62, %64 : vector<16x128xf32>
    %c0_69 = arith.constant 0 : index
    %c0_70 = arith.constant 0 : index
    %66 = vector.load %arg7[%c0_69, %c0_70] : memref<1x128xf32, #tpu.memory_space<vmem>>, vector<1x128xf32>
    %67 = vector.broadcast %66 : vector<1x128xf32> to vector<16x128xf32>
    %68 = arith.addf %65, %67 : vector<16x128xf32>
    %cst_71 = arith.constant 0.000000e+00 : f32
    %69 = vector.broadcast %cst_71 : f32 to vector<16x128xf32>
    %70 = arith.maximumf %68, %69 : vector<16x128xf32>
    %71 = vector.shape_cast %70 : vector<16x128xf32> to vector<1x16x128xf32>
    %c0_72 = arith.constant 0 : index
    %c0_73 = arith.constant 0 : index
    %c0_74 = arith.constant 0 : index
    %72 = vector.load %arg8[%c0_72, %c0_73, %c0_74] : memref<1x16x128xf32, #tpu.memory_space<vmem>>, vector<1x16x128xf32>
    tpu.vector_store %arg8[%c0_72, %c0_73, %c0_74], %71 {strides = array<i32>} : memref<1x16x128xf32, #tpu.memory_space<vmem>>, vector<1x16x128xf32>,
    return
  }
  func.func @transform_0(%arg0: i32) -> (i32, i32, i32) {
    %c0_i32 = arith.constant 0 : i32
    %c0_i32_0 = arith.constant 0 : i32
    %c0_i32_1 = arith.constant 0 : i32
    return %arg0, %c0_i32, %c0_i32_0 : i32, i32, i32
  }
  func.func @transform_1(%arg0: i32) -> (i32, i32, i32) {
    %c0_i32 = arith.constant 0 : i32
    %c0_i32_0 = arith.constant 0 : i32
    %c0_i32_1 = arith.constant 0 : i32
    %c0_i32_2 = arith.constant 0 : i32
    return %c0_i32, %c0_i32_0, %c0_i32_1 : i32, i32, i32
  }
  func.func @transform_2(%arg0: i32) -> (i32, i32) {
    %c0_i32 = arith.constant 0 : i32
    %c0_i32_0 = arith.constant 0 : i32
    %c0_i32_1 = arith.constant 0 : i32
    return %c0_i32, %c0_i32_0 : i32, i32
  }
  func.func @transform_3(%arg0: i32) -> (i32, i32) {
    %c0_i32 = arith.constant 0 : i32
    %c0_i32_0 = arith.constant 0 : i32
    %c0_i32_1 = arith.constant 0 : i32
    return %c0_i32, %c0_i32_0 : i32, i32
  }
  func.func @transform_4(%arg0: i32) -> (i32, i32, i32) {
    %c0_i32 = arith.constant 0 : i32
    %c0_i32_0 = arith.constant 0 : i32
    %c0_i32_1 = arith.constant 0 : i32
    %c0_i32_2 = arith.constant 0 : i32
    return %c0_i32, %c0_i32_0, %c0_i32_1 : i32, i32, i32
  }
  func.func @transform_5(%arg0: i32) -> (i32, i32) {
    %c0_i32 = arith.constant 0 : i32
    %c0_i32_0 = arith.constant 0 : i32
    %c0_i32_1 = arith.constant 0 : i32
    return %c0_i32, %c0_i32_0 : i32, i32
  }
  func.func @transform_6(%arg0: i32) -> (i32, i32) {
    %c0_i32 = arith.constant 0 : i32
    %c0_i32_0 = arith.constant 0 : i32
    %c0_i32_1 = arith.constant 0 : i32
    return %c0_i32, %c0_i32_0 : i32, i32
  }
  func.func @transform_7(%arg0: i32) -> (i32, i32, i32) {
    %c0_i32 = arith.constant 0 : i32
    %c0_i32_0 = arith.constant 0 : i32
    %c0_i32_1 = arith.constant 0 : i32
    return %arg0, %c0_i32, %c0_i32_0 : i32, i32, i32
  }
}

</mosaic_0001>

<llo_original>
// kernel: tpu_custom_call.1
$region0: #{tpu_custom_call.1}
  #allocation0 [shape = 'u32[]', space=smem, size = 0x4, offset = 0x4, fixed_abs, tag = 'smem constant byte address 0x4 - core index']
  #allocation1 [shape = 'u32[144,128]{1,0:T(1,128)}', space=vmem, size = 0x12000, scoped, tag = 'internal scratch']
  #allocation2 [shape = 'f32[1,18,64]{2,1,0:T(8,128)}', space=vmem, size = 0x3000, scoped, tag = 'scratch operand']
  #allocation3 [shape = 'f32[1,18,128]{2,1,0:T(8,128)}', space=vmem, size = 0x3000, scoped, tag = 'scratch operand']
  %s0 = inlined_call_operand.hbm [shape: bf16[2,16,64], index: 0, kind: input, shape index: {}]
  %s1 = inlined_call_operand.hbm [shape: bf16[3,64,128], index: 1, kind: input, shape index: {}]
  %s2 = inlined_call_operand.vmem [shape: f32[1,128], index: 2, kind: input, shape index: {}]
  %s3 = inlined_call_operand.vmem [shape: f32[1,128], index: 3, kind: input, shape index: {}]
  %s4 = inlined_call_operand.hbm [shape: bf16[3,128,128], index: 4, kind: input, shape index: {}]
  %s5 = inlined_call_operand.vmem [shape: f32[1,128], index: 5, kind: input, shape index: {}]
  %s6 = inlined_call_operand.vmem [shape: f32[1,128], index: 6, kind: input, shape index: {}]
  %s7 = inlined_call_operand.hbm [shape: f32[2,16,128], index: 7, kind: output, shape index: {}]
  %s8 = sld [smem:[#allocation0]]
  $region73: #{tpu_custom_call.1} parent=0
    _
  %s10 = ssub.s32 1, %s8
  %s11 = scalar_select 0, %s10, %s8
  $region1: #{tpu_custom_call.1} parent=0
    #allocation4 [shape = 'u8[8192]{0}', space=vmem, size = 0x2000, scoped, tag = 'input window, operand 0']
    #allocation5 [shape = 's32[2]{0}', space=sflag, size = 0x8, scoped, tag = 'scoped memory for tpu_custom_call.1']
    #allocation6 [shape = 's32[2]{0}', space=sflag, size = 0x8, scoped, tag = 'scoped memory for tpu_custom_call.1']
    #allocation7 [shape = 'u8[49152]{0}', space=vmem, size = 0xc000, scoped, tag = 'input window, operand 1, single buffered']
    #allocation8 [shape = 's32[1]{0}', space=sflag, size = 0x4, scoped, tag = 'scoped memory for tpu_custom_call.1']
    #allocation9 [shape = 'u8[98304]{0}', space=vmem, size = 0x18000, scoped, tag = 'input window, operand 4, single buffered']
    #allocation10 [shape = 'u8[16384]{0}', space=vmem, size = 0x4000, scoped, tag = 'output window, operand 0']
    %12 = vsyncpa [#allocation5], 0
    %s13 = scalar_lea.sflag [#allocation5], 1
    %14 = vsyncpa %s13, 0
    %15 = vsyncpa [#allocation8], 0
    %16 = vsyncpa [#allocation6], 0
    %s17 = scalar_lea.sflag [#allocation6], 1
    %18 = vsyncpa %s17, 0
    loop: start=0, step=1, limit=4
    $region2: #{tpu_custom_call.1} parent=1 // loop_pre_header
      _
    $region3: #{tpu_custom_call.1} parent=1 // loop_header
      %s20 = sphi 0, %s24
      %p21 = scmp.ge.s32.totalorder %s20, 4
      %s30 = sphi 0, %s32
      %s33 = sphi 0, %s30
      %s34 = sphi 0, %s33
      %s50 = sphi 0, %s34
      %s54 = sphi 0, %s54
      %s56 = sphi 0, %s54
      %s57 = sphi 0, %s56
      %s71 = sphi 0, %s57
      %s75 = sphi 0, %s75
      %s77 = sphi 0, %s75
      %s78 = sphi 0, %s77
      %s92 = sphi 0, %s78
      %s96 = sphi 0, %s96
      %s98 = sphi 0, %s96
      %s99 = sphi 0, %s98
      %s113 = sphi 0, %s99
      %s117 = sphi 0, %s117
      %s119 = sphi 0, %s117
      %s120 = sphi 0, %s119
      %s134 = sphi 0, %s120
      %s138 = sphi 0, %s138
      %s140 = sphi 0, %s138
      %s141 = sphi 0, %s140
      %s155 = sphi 0, %s141
      %s159 = sphi 0, %s159
      %s161 = sphi 0, %s159
      %s162 = sphi 0, %s161
      %s176 = sphi 0, %s162
      %s182 = sphi 0, %s184
      %s185 = sphi 0, %s182
      %s186 = sphi 0, %s185
      %s202 = sphi 0, %s186
    $region4: #{tpu_custom_call.1} parent=1 // loop_header_branch
      %23 = sbr.rel (%p21) target = $region8
    $region5: #{tpu_custom_call.1} parent=1 // loop_body
      %s25 = ssub.s32 %s20, 1
      %s26 = ssub.s32 %s20, 2
      %s27 = sadd.s32 %s20, 1
      %s28 = ssub.s32 %s20, %s27
      %p29 = scmp.eq.s32.totalorder %s28, 0
      %s31 = sadd.s32 %s30, 1
      %s32 = scalar_select %p29, %s30, %s31
      %p35 = pneg %p29
      %p36 = scmp.eq.s32.totalorder %s20, 1
      %p37 = por %p35, %p36
      %p38 = scmp.ne.s32.totalorder %s30, %s33
      %p39 = scmp.eq.s32.totalorder %s20, 0
      %p40 = por %p38, %p39
      %p41 = scmp.ne.s32.totalorder %s30, %s33
      %p42 = scmp.eq.s32.totalorder %s25, 1
      %p43 = por %p41, %p42
      %p44 = scmp.ne.s32.totalorder %s33, %s34
      %p45 = scmp.eq.s32.totalorder %s25, 0
      %p46 = por %p44, %p45
      %p47 = scmp.ne.s32.totalorder %s33, %s34
      %p48 = scmp.eq.s32.totalorder %s26, 1
      %p49 = por %p47, %p48
      %p51 = scmp.ne.s32.totalorder %s34, %s50
      %p52 = scmp.eq.s32.totalorder %s26, 0
      %p53 = por %p51, %p52
      %s55 = sadd.s32 %s54, 1
      %p58 = scmp.eq.s32.totalorder %s20, 1
      %p59 = scmp.ne.s32.totalorder %s54, %s56
      %p60 = scmp.eq.s32.totalorder %s20, 0
      %p61 = por %p59, %p60
      %p62 = scmp.ne.s32.totalorder %s54, %s56
      %p63 = scmp.eq.s32.totalorder %s25, 1
      %p64 = por %p62, %p63
      %p65 = scmp.ne.s32.totalorder %s56, %s57
      %p66 = scmp.eq.s32.totalorder %s25, 0
      %p67 = por %p65, %p66
      %p68 = scmp.ne.s32.totalorder %s56, %s57
      %p69 = scmp.eq.s32.totalorder %s26, 1
      %p70 = por %p68, %p69
      %p72 = scmp.ne.s32.totalorder %s57, %s71
      %p73 = scmp.eq.s32.totalorder %s26, 0
      %p74 = por %p72, %p73
      %s76 = sadd.s32 %s75, 1
      %p79 = scmp.eq.s32.totalorder %s20, 1
      %p80 = scmp.ne.s32.totalorder %s75, %s77
      %p81 = scmp.eq.s32.totalorder %s20, 0
      %p82 = por %p80, %p81
      %p83 = scmp.ne.s32.totalorder %s75, %s77
      %p84 = scmp.eq.s32.totalorder %s25, 1
      %p85 = por %p83, %p84
      %p86 = scmp.ne.s32.totalorder %s77, %s78
      %p87 = scmp.eq.s32.totalorder %s25, 0
      %p88 = por %p86, %p87
      %p89 = scmp.ne.s32.totalorder %s77, %s78
      %p90 = scmp.eq.s32.totalorder %s26, 1
      %p91 = por %p89, %p90
      %p93 = scmp.ne.s32.totalorder %s78, %s92
      %p94 = scmp.eq.s32.totalorder %s26, 0
      %p95 = por %p93, %p94
      %s97 = sadd.s32 %s96, 1
      %p100 = scmp.eq.s32.totalorder %s20, 1
      %p101 = scmp.ne.s32.totalorder %s96, %s98
      %p102 = scmp.eq.s32.totalorder %s20, 0
      %p103 = por %p101, %p102
      %p104 = scmp.ne.s32.totalorder %s96, %s98
      %p105 = scmp.eq.s32.totalorder %s25, 1
      %p106 = por %p104, %p105
      %p107 = scmp.ne.s32.totalorder %s98, %s99
      %p108 = scmp.eq.s32.totalorder %s25, 0
      %p109 = por %p107, %p108
      %p110 = scmp.ne.s32.totalorder %s98, %s99
      %p111 = scmp.eq.s32.totalorder %s26, 1
      %p112 = por %p110, %p111
      %p114 = scmp.ne.s32.totalorder %s99, %s113
      %p115 = scmp.eq.s32.totalorder %s26, 0
      %p116 = por %p114, %p115
      %s118 = sadd.s32 %s117, 1
      %p121 = scmp.eq.s32.totalorder %s20, 1
      %p122 = scmp.ne.s32.totalorder %s117, %s119
      %p123 = scmp.eq.s32.totalorder %s20, 0
      %p124 = por %p122, %p123
      %p125 = scmp.ne.s32.totalorder %s117, %s119
      %p126 = scmp.eq.s32.totalorder %s25, 1
      %p127 = por %p125, %p126
      %p128 = scmp.ne.s32.totalorder %s119, %s120
      %p129 = scmp.eq.s32.totalorder %s25, 0
      %p130 = por %p128, %p129
      %p131 = scmp.ne.s32.totalorder %s119, %s120
      %p132 = scmp.eq.s32.totalorder %s26, 1
      %p133 = por %p131, %p132
      %p135 = scmp.ne.s32.totalorder %s120, %s134
      %p136 = scmp.eq.s32.totalorder %s26, 0
      %p137 = por %p135, %p136
      %s139 = sadd.s32 %s138, 1
      %p142 = scmp.eq.s32.totalorder %s20, 1
      %p143 = scmp.ne.s32.totalorder %s138, %s140
      %p144 = scmp.eq.s32.totalorder %s20, 0
      %p145 = por %p143, %p144
      %p146 = scmp.ne.s32.totalorder %s138, %s140
      %p147 = scmp.eq.s32.totalorder %s25, 1
      %p148 = por %p146, %p147
      %p149 = scmp.ne.s32.totalorder %s140, %s141
      %p150 = scmp.eq.s32.totalorder %s25, 0
      %p151 = por %p149, %p150
      %p152 = scmp.ne.s32.totalorder %s140, %s141
      %p153 = scmp.eq.s32.totalorder %s26, 1
      %p154 = por %p152, %p153
      %p156 = scmp.ne.s32.totalorder %s141, %s155
      %p157 = scmp.eq.s32.totalorder %s26, 0
      %p158 = por %p156, %p157
      %s160 = sadd.s32 %s159, 1
      %p163 = scmp.eq.s32.totalorder %s20, 1
      %p164 = scmp.ne.s32.totalorder %s159, %s161
      %p165 = scmp.eq.s32.totalorder %s20, 0
      %p166 = por %p164, %p165
      %p167 = scmp.ne.s32.totalorder %s159, %s161
      %p168 = scmp.eq.s32.totalorder %s25, 1
      %p169 = por %p167, %p168
      %p170 = scmp.ne.s32.totalorder %s161, %s162
      %p171 = scmp.eq.s32.totalorder %s25, 0
      %p172 = por %p170, %p171
      %p173 = scmp.ne.s32.totalorder %s161, %s162
      %p174 = scmp.eq.s32.totalorder %s26, 1
      %p175 = por %p173, %p174
      %p177 = scmp.ne.s32.totalorder %s162, %s176
      %p178 = scmp.eq.s32.totalorder %s26, 0
      %p179 = por %p177, %p178
      %s180 = ssub.s32 %s20, %s27
      %p181 = scmp.eq.s32.totalorder %s180, 0
      %s183 = sadd.s32 %s182, 1
      %s184 = scalar_select %p181, %s182, %s183
      %p187 = pneg %p181
      %p188 = scmp.eq.s32.totalorder %s20, 1
      %p189 = por %p187, %p188
      %p190 = scmp.ne.s32.totalorder %s182, %s185
      %p191 = scmp.eq.s32.totalorder %s20, 0
      %p192 = por %p190, %p191
      %p193 = scmp.ne.s32.totalorder %s182, %s185
      %p194 = scmp.eq.s32.totalorder %s25, 1
      %p195 = por %p193, %p194
      %p196 = scmp.ne.s32.totalorder %s185, %s186
      %p197 = scmp.eq.s32.totalorder %s25, 0
      %p198 = por %p196, %p197
      %p199 = scmp.ne.s32.totalorder %s185, %s186
      %p200 = scmp.eq.s32.totalorder %s26, 1
      %p201 = por %p199, %p200
      %p203 = scmp.ne.s32.totalorder %s186, %s202
      %p204 = scmp.eq.s32.totalorder %s26, 0
      %p205 = por %p203, %p204
      %p206 = scmp.le.s32.totalorder 1, %s20
      %p207 = scmp.lt.s32.totalorder %s20, 3
      %p208 = pnand %p206, %p207
      %p209 = pneg %p208
      // Predicated region
      $region9: #{tpu_custom_call.1} parent=5 // pred_check
        _
      $region10: #{tpu_custom_call.1} parent=5 // pred_check_branch
        %211 = sbr.rel (%p208) target = $region12
      $region11: #{tpu_custom_call.1} parent=5 // pred_region
        %s212 = ssub.s32 %s20, 1
        // Predicated region
        $region13: #{tpu_custom_call.1} parent=11 // pred_check
          %p213 = pneg %p67
        $region14: #{tpu_custom_call.1} parent=11 // pred_check_branch
          %215 = sbr.rel (%p213) target = $region16
        $region15: #{tpu_custom_call.1} parent=11 // pred_region
          %s217 = ssub.s32 1536, 1536
          %218 = vsyncadd [#allocation8], %s217
          %s219 = sshll.u32 [#allocation7], 4
          %s220 = int_to_ptr.vmem [resolvable:$true] %s219
          %225 = dma.hbm_to_vmem [thread:$0]  %s1, 1536, %s220, [#allocation8], 64, 64, 4
        $region16: #{tpu_custom_call.1} parent=11 // pred_fallthru
          _
        // Predicated region
        $region17: #{tpu_custom_call.1} parent=11 // pred_check
          %p226 = pneg %p88
        $region18: #{tpu_custom_call.1} parent=11 // pred_check_branch
          %228 = sbr.rel (%p226) target = $region20
        $region19: #{tpu_custom_call.1} parent=11 // pred_region
          _
        $region20: #{tpu_custom_call.1} parent=11 // pred_fallthru
          _
        // Predicated region
        $region21: #{tpu_custom_call.1} parent=11 // pred_check
          %p229 = pneg %p109
        $region22: #{tpu_custom_call.1} parent=11 // pred_check_branch
          %231 = sbr.rel (%p229) target = $region24
        $region23: #{tpu_custom_call.1} parent=11 // pred_region
          _
        $region24: #{tpu_custom_call.1} parent=11 // pred_fallthru
          _
        // Predicated region
        $region25: #{tpu_custom_call.1} parent=11 // pred_check
          %p232 = pneg %p130
        $region26: #{tpu_custom_call.1} parent=11 // pred_check_branch
          %234 = sbr.rel (%p232) target = $region28
        $region27: #{tpu_custom_call.1} parent=11 // pred_region
          %s236 = ssub.s32 3072, 3072
          %237 = vsyncadd [#allocation8], %s236
          %s238 = sshll.u32 [#allocation9], 4
          %s239 = int_to_ptr.vmem [resolvable:$true] %s238
          %244 = dma.hbm_to_vmem [thread:$0]  %s4, 3072, %s239, [#allocation8], 64, 64, 4
        $region28: #{tpu_custom_call.1} parent=11 // pred_fallthru
          _
        // Predicated region
        $region29: #{tpu_custom_call.1} parent=11 // pred_check
          %p245 = pneg %p151
        $region30: #{tpu_custom_call.1} parent=11 // pred_check_branch
          %247 = sbr.rel (%p245) target = $region32
        $region31: #{tpu_custom_call.1} parent=11 // pred_region
          _
        $region32: #{tpu_custom_call.1} parent=11 // pred_fallthru
          _
        // Predicated region
        $region33: #{tpu_custom_call.1} parent=11 // pred_check
          %p248 = pneg %p172
        $region34: #{tpu_custom_call.1} parent=11 // pred_check_branch
          %250 = sbr.rel (%p248) target = $region36
        $region35: #{tpu_custom_call.1} parent=11 // pred_region
          _
        $region36: #{tpu_custom_call.1} parent=11 // pred_fallthru
          _
      $region12: #{tpu_custom_call.1} parent=5 // pred_fallthru
        _
      %p251 = scmp.lt.s32.totalorder %s20, 2
      // Predicated region
      $region37: #{tpu_custom_call.1} parent=5 // pred_check
        %p252 = pneg %p251
      $region38: #{tpu_custom_call.1} parent=5 // pred_check_branch
        %254 = sbr.rel (%p252) target = $region40
      $region39: #{tpu_custom_call.1} parent=5 // pred_region
        // Predicated region
        $region41: #{tpu_custom_call.1} parent=39 // pred_check
          %p255 = pneg %p40
        $region42: #{tpu_custom_call.1} parent=39 // pred_check_branch
          %257 = sbr.rel (%p255) target = $region44
        $region43: #{tpu_custom_call.1} parent=39 // pred_region
          %s258 = sand.u32 %s30, 1
          %s259 = scalar_lea.sflag [#allocation5], %s258
          %s260 = sand.u32 %s30, 1
          %s261 = smul.addr %s260, 8
          %s262 = scalar_lea.vmem [#allocation4], %s261
          %s264 = ssub.s32 128, 128
          %265 = vsyncadd %s259, %s264
          %s266 = smul.addr %s20, 2
          %s267 = smul.addr %s266, 64
          %s268 = scalar_lea.hbm %s0, %s267
          %s269 = sshll.u32 %s262, 4
          %s270 = int_to_ptr.vmem [resolvable:$true] %s269
          %275 = dma.hbm_to_vmem [thread:$0]  %s268, 128, %s270, %s259, 64, 64, 4
        $region44: #{tpu_custom_call.1} parent=39 // pred_fallthru
          _
      $region40: #{tpu_custom_call.1} parent=5 // pred_fallthru
        _
      %p276 = scmp.le.s32.totalorder 1, %s20
      %p277 = scmp.lt.s32.totalorder %s20, 3
      %p278 = pnand %p276, %p277
      %p279 = pneg %p278
      // Predicated region
      $region45: #{tpu_custom_call.1} parent=5 // pred_check
        _
      $region46: #{tpu_custom_call.1} parent=5 // pred_check_branch
        %281 = sbr.rel (%p278) target = $region48
      $region47: #{tpu_custom_call.1} parent=5 // pred_region
        %s282 = ssub.s32 %s20, 1
        %s283 = sand.u32 %s33, 1
        %s284 = scalar_lea.sflag [#allocation5], %s283
        %s285 = sand.u32 %s33, 1
        %s286 = smul.addr %s285, 8
        %s287 = scalar_lea.vmem [#allocation4], %s286
        // Predicated region
        $region49: #{tpu_custom_call.1} parent=47 // pred_check
          %p288 = pneg %p46
        $region50: #{tpu_custom_call.1} parent=47 // pred_check_branch
          %290 = sbr.rel (%p288) target = $region52
        $region51: #{tpu_custom_call.1} parent=47 // pred_region
          %291 = dma.done %s284, 128
        $region52: #{tpu_custom_call.1} parent=47 // pred_fallthru
          _
        // Predicated region
        $region53: #{tpu_custom_call.1} parent=47 // pred_check
          %p292 = pneg %p67
        $region54: #{tpu_custom_call.1} parent=47 // pred_check_branch
          %294 = sbr.rel (%p292) target = $region56
        $region55: #{tpu_custom_call.1} parent=47 // pred_region
          %295 = dma.done [#allocation8], 1536
        $region56: #{tpu_custom_call.1} parent=47 // pred_fallthru
          _
        // Predicated region
        $region57: #{tpu_custom_call.1} parent=47 // pred_check
          %p296 = pneg %p130
        $region58: #{tpu_custom_call.1} parent=47 // pred_check_branch
          %298 = sbr.rel (%p296) target = $region60
        $region59: #{tpu_custom_call.1} parent=47 // pred_region
          %299 = dma.done [#allocation8], 3072
        $region60: #{tpu_custom_call.1} parent=47 // pred_fallthru
          _
        %s300 = sand.u32 %s33, 1
        %s301 = scalar_lea.sflag [#allocation5], %s300
        %s302 = sand.u32 %s33, 1
        %s303 = smul.addr %s302, 8
        %s304 = scalar_lea.vmem [#allocation4], %s303
        %p305 = pneg %p46
        %p306 = pneg %p43
        %p307 = pneg %p67
        %p308 = pneg %p64
        %p309 = pneg %p88
        %p310 = pneg %p85
        %p311 = pneg %p109
        %p312 = pneg %p106
        %p313 = pneg %p130
        %p314 = pneg %p127
        %p315 = pneg %p151
        %p316 = pneg %p148
        %p317 = pneg %p172
        %p318 = pneg %p169
        %p319 = pneg %p198
        %p320 = pneg %p195
        %s321 = sand.u32 %s185, 1
        %s322 = scalar_lea.sflag [#allocation6], %s321
        %s323 = sand.u32 %s185, 1
        %s324 = smul.addr %s323, 16
        %s325 = scalar_lea.vmem [#allocation10], %s324
        %vm327 = vcmask 516096
        %328 = vst.msk [vmem:[#allocation2] sm:$0x1] %vm327, 0.0
        %329 = vst.msk [vmem:[#allocation2 + $0x11] sm:$0x1] %vm327, 0.0
        %v330 = vld [vmem:[%s287] sm:$0xf]
        %v331 = vld [vmem:[%s287 + $0x4] sm:$0xf]
        %v332 = vunpack.c.l.bf16 %v330
        %v333 = vunpack.c.l.bf16 %v331
        %vm334 = vcmask 523264
        %335 = vst.msk [vmem:[#allocation2 + $0x1] sm:$0xff] %vm334, %v332
        %336 = vst.msk [vmem:[#allocation2 + $0x9] sm:$0xff] %vm334, %v333
        %v337 = vld [vmem:[#allocation2] sm:$0xff]
        %v338 = vld [vmem:[#allocation2 + $0x8] sm:$0xff]
        %v339 = vpack.c.bf16 %v338, %v337
        %v340 = vld [vmem:[#allocation7] sm:$0xf]
        %v341 = vld [vmem:[#allocation7 + $0x4] sm:$0xf]
        %v342 = vld [vmem:[#allocation7 + $0x8] sm:$0xf]
        %v343 = vld [vmem:[#allocation7 + $0xc] sm:$0xf]
        %v344 = vld [vmem:[#allocation7 + $0x10] sm:$0xf]
        %v345 = vld [vmem:[#allocation7 + $0x14] sm:$0xf]
        %v346 = vld [vmem:[#allocation7 + $0x18] sm:$0xf]
        %v347 = vld [vmem:[#allocation7 + $0x1c] sm:$0xf]
        %v348 = vld [vmem:[#allocation2 + $0x1] sm:$0xff]
        %v349 = vld [vmem:[#allocation2 + $0x9] sm:$0xff]
        %v350 = vpack.c.bf16 %v349, %v348
        %s351 = scalar_lea.vmem [#allocation7], 32
        %v352 = vld [vmem:[%s351] sm:$0xf]
        %v353 = vld [vmem:[%s351 + $0x4] sm:$0xf]
        %v354 = vld [vmem:[%s351 + $0x8] sm:$0xf]
        %v355 = vld [vmem:[%s351 + $0xc] sm:$0xf]
        %v356 = vld [vmem:[%s351 + $0x10] sm:$0xf]
        %v357 = vld [vmem:[%s351 + $0x14] sm:$0xf]
        %v358 = vld [vmem:[%s351 + $0x18] sm:$0xf]
        %v359 = vld [vmem:[%s351 + $0x1c] sm:$0xf]
        %v368 = vunpack.c.l.b16 %v352
        %v369 = vunpack.c.l.b16 %v353
        %v370 = vunpack.c.l.b16 %v354
        %v371 = vunpack.c.l.b16 %v355
        %v372 = vunpack.c.l.b16 %v356
        %v373 = vunpack.c.l.b16 %v357
        %v374 = vunpack.c.l.b16 %v358
        %v375 = vunpack.c.l.b16 %v359
        %v376 = vpack.c.b16 %v369, %v368
        %v377 = vpack.c.b16 %v371, %v370
        %v378 = vpack.c.b16 %v373, %v372
        %v379 = vpack.c.b16 %v375, %v374
        %v385 = vsel %vm334, %v350, 0
        %387 = vmatprep.subr.bf16.mxu0 0
        %388 = vmatpush1.bf16.msra.mxu0 %v376
        %389 = vmatprep.subr.bf16.mxu0 0
        %390 = vmatpush1.bf16.msra.mxu0 %v377
        %391 = vmatprep.subr.bf16.mxu0 0
        %392 = vmatpush1.bf16.msra.mxu0 %v378
        %393 = vmatprep.subr.bf16.mxu0 0
        %394 = vmatpush1.bf16.msra.mxu0 %v379
        %395 = vmatprep.subr.bf16.mxu0 0
        %396 = vmatpush1.bf16.msra.mxu0 0
        %397 = vmatprep.subr.bf16.mxu0 0
        %398 = vmatpush1.bf16.msra.mxu0 0
        %399 = vmatprep.subr.bf16.mxu0 0
        %400 = vmatpush1.bf16.msra.mxu0 0
        %401 = vmatprep.subr.bf16.mxu0 0
        %402 = vmatpush1.bf16.msra.mxu0 0
        %403 = vmatprep.subr.bf16.mxu0 0
        %404 = vmatpush1.bf16.msra.mxu0 0
        %405 = vmatprep.subr.bf16.mxu0 0
        %406 = vmatpush1.bf16.msra.mxu0 0
        %407 = vmatprep.subr.bf16.mxu0 0
        %408 = vmatpush1.bf16.msra.mxu0 0
        %409 = vmatprep.subr.bf16.mxu0 0
        %410 = vmatpush1.bf16.msra.mxu0 0
        %411 = vmatprep.subr.bf16.mxu0 0
        %412 = vmatpush1.bf16.msra.mxu0 0
        %413 = vmatprep.subr.bf16.mxu0 0
        %414 = vmatpush1.bf16.msra.mxu0 0
        %415 = vmatprep.subr.bf16.mxu0 0
        %416 = vmatpush1.bf16.msra.mxu0 0
        %417 = vmatprep.subr.bf16.mxu0 0
        %418 = vmatpush1.bf16.msra.mxu0 0
        %419 = vmatprep.mubr.bf16.mxu0 0
        %420 = vmatmul.mubr.bf16.gmra.mrb[0].mxu0 %v385
        %v421 = vpop.f32.mrb[0].mxu0
        %v422 = vadd.f32 0.0, %v421
        %v423 = vpop.f32.mrb[0].mxu0
        %v424 = vpop.f32.mrb[0].mxu0
        %v425 = vadd.f32 0.0, %v424
        %v426 = vpop.f32.mrb[0].mxu0
        %427 = vdwg.mxu0
        %v436 = vunpack.c.l.b16 %v340
        %v437 = vunpack.c.l.b16 %v341
        %v438 = vunpack.c.l.b16 %v342
        %v439 = vunpack.c.l.b16 %v343
        %v440 = vunpack.c.l.b16 %v344
        %v441 = vunpack.c.l.b16 %v345
        %v442 = vunpack.c.l.b16 %v346
        %v443 = vunpack.c.l.b16 %v347
        %v444 = vpack.c.b16 %v437, %v436
        %v445 = vpack.c.b16 %v439, %v438
        %v446 = vpack.c.b16 %v441, %v440
        %v447 = vpack.c.b16 %v443, %v442
        %v453 = vsel %vm334, %v339, 0
        %455 = vmatprep.subr.bf16.mxu0 0
        %456 = vmatpush1.bf16.msra.mxu0 %v444
        %457 = vmatprep.subr.bf16.mxu0 0
        %458 = vmatpush1.bf16.msra.mxu0 %v445
        %459 = vmatprep.subr.bf16.mxu0 0
        %460 = vmatpush1.bf16.msra.mxu0 %v446
        %461 = vmatprep.subr.bf16.mxu0 0
        %462 = vmatpush1.bf16.msra.mxu0 %v447
        %463 = vmatprep.subr.bf16.mxu0 0
        %464 = vmatpush1.bf16.msra.mxu0 0
        %465 = vmatprep.subr.bf16.mxu0 0
        %466 = vmatpush1.bf16.msra.mxu0 0
        %467 = vmatprep.subr.bf16.mxu0 0
        %468 = vmatpush1.bf16.msra.mxu0 0
        %469 = vmatprep.subr.bf16.mxu0 0
        %470 = vmatpush1.bf16.msra.mxu0 0
        %471 = vmatprep.subr.bf16.mxu0 0
        %472 = vmatpush1.bf16.msra.mxu0 0
        %473 = vmatprep.subr.bf16.mxu0 0
        %474 = vmatpush1.bf16.msra.mxu0 0
        %475 = vmatprep.subr.bf16.mxu0 0
        %476 = vmatpush1.bf16.msra.mxu0 0
        %477 = vmatprep.subr.bf16.mxu0 0
        %478 = vmatpush1.bf16.msra.mxu0 0
        %479 = vmatprep.subr.bf16.mxu0 0
        %480 = vmatpush1.bf16.msra.mxu0 0
        %481 = vmatprep.subr.bf16.mxu0 0
        %482 = vmatpush1.bf16.msra.mxu0 0
        %483 = vmatprep.subr.bf16.mxu0 0
        %484 = vmatpush1.bf16.msra.mxu0 0
        %485 = vmatprep.subr.bf16.mxu0 0
        %486 = vmatpush1.bf16.msra.mxu0 0
        %487 = vmatprep.mubr.bf16.mxu0 0
        %488 = vmatmul.mubr.bf16.gmra.mrb[0].mxu0 %v453
        %v489 = vpop.f32.mrb[0].mxu0
        %v490 = vadd.f32 %v422, %v489
        %v491 = vpop.f32.mrb[0].mxu0
        %v492 = vpop.f32.mrb[0].mxu0
        %v493 = vadd.f32 %v425, %v492
        %v494 = vpop.f32.mrb[0].mxu0
        %495 = vdwg.mxu0
        %v496 = vld [vmem:[#allocation2 + $0x2] sm:$0xff]
        %v497 = vld [vmem:[#allocation2 + $0xa] sm:$0xff]
        %v498 = vpack.c.bf16 %v497, %v496
        %s499 = scalar_lea.vmem [#allocation7], 64
        %v500 = vld [vmem:[%s499] sm:$0xf]
        %v501 = vld [vmem:[%s499 + $0x4] sm:$0xf]
        %v502 = vld [vmem:[%s499 + $0x8] sm:$0xf]
        %v503 = vld [vmem:[%s499 + $0xc] sm:$0xf]
        %v504 = vld [vmem:[%s499 + $0x10] sm:$0xf]
        %v505 = vld [vmem:[%s499 + $0x14] sm:$0xf]
        %v506 = vld [vmem:[%s499 + $0x18] sm:$0xf]
        %v507 = vld [vmem:[%s499 + $0x1c] sm:$0xf]
        %v516 = vunpack.c.l.b16 %v500
        %v517 = vunpack.c.l.b16 %v501
        %v518 = vunpack.c.l.b16 %v502
        %v519 = vunpack.c.l.b16 %v503
        %v520 = vunpack.c.l.b16 %v504
        %v521 = vunpack.c.l.b16 %v505
        %v522 = vunpack.c.l.b16 %v506
        %v523 = vunpack.c.l.b16 %v507
        %v524 = vpack.c.b16 %v517, %v516
        %v525 = vpack.c.b16 %v519, %v518
        %v526 = vpack.c.b16 %v521, %v520
        %v527 = vpack.c.b16 %v523, %v522
        %v533 = vsel %vm334, %v498, 0
        %535 = vmatprep.subr.bf16.mxu0 0
        %536 = vmatpush1.bf16.msra.mxu0 %v524
        %537 = vmatprep.subr.bf16.mxu0 0
        %538 = vmatpush1.bf16.msra.mxu0 %v525
        %539 = vmatprep.subr.bf16.mxu0 0
        %540 = vmatpush1.bf16.msra.mxu0 %v526
        %541 = vmatprep.subr.bf16.mxu0 0
        %542 = vmatpush1.bf16.msra.mxu0 %v527
        %543 = vmatprep.subr.bf16.mxu0 0
        %544 = vmatpush1.bf16.msra.mxu0 0
        %545 = vmatprep.subr.bf16.mxu0 0
        %546 = vmatpush1.bf16.msra.mxu0 0
        %547 = vmatprep.subr.bf16.mxu0 0
        %548 = vmatpush1.bf16.msra.mxu0 0
        %549 = vmatprep.subr.bf16.mxu0 0
        %550 = vmatpush1.bf16.msra.mxu0 0
        %551 = vmatprep.subr.bf16.mxu0 0
        %552 = vmatpush1.bf16.msra.mxu0 0
        %553 = vmatprep.subr.bf16.mxu0 0
        %554 = vmatpush1.bf16.msra.mxu0 0
        %555 = vmatprep.subr.bf16.mxu0 0
        %556 = vmatpush1.bf16.msra.mxu0 0
        %557 = vmatprep.subr.bf16.mxu0 0
        %558 = vmatpush1.bf16.msra.mxu0 0
        %559 = vmatprep.subr.bf16.mxu0 0
        %560 = vmatpush1.bf16.msra.mxu0 0
        %561 = vmatprep.subr.bf16.mxu0 0
        %562 = vmatpush1.bf16.msra.mxu0 0
        %563 = vmatprep.subr.bf16.mxu0 0
        %564 = vmatpush1.bf16.msra.mxu0 0
        %565 = vmatprep.subr.bf16.mxu0 0
        %566 = vmatpush1.bf16.msra.mxu0 0
        %567 = vmatprep.mubr.bf16.mxu0 0
        %568 = vmatmul.mubr.bf16.gmra.mrb[0].mxu0 %v533
        %v569 = vpop.f32.mrb[0].mxu0
        %v570 = vadd.f32 0.0, %v569
        %v571 = vpop.f32.mrb[0].mxu0
        %v572 = vpop.f32.mrb[0].mxu0
        %v573 = vadd.f32 0.0, %v572
        %v574 = vpop.f32.mrb[0].mxu0
        %575 = vdwg.mxu0
        %v576 = vadd.f32 %v490, %v570
        %v577 = vadd.f32 %v493, %v573
        %v578 = vld [vmem:[%s2] sm:$0x1]
        %v580 = vlaneseq
        %v581 = vshrl.u32 %v580, 7
        %v582 = vsub.s32 0, %v581
        %v583 = vrot.slane %v578, %v582
        %v585 = vmul.f32 %v576, %v583
        %v586 = vmul.f32 %v577, %v583
        %v587 = vld [vmem:[%s3] sm:$0x1]
        %v589 = vlaneseq
        %v590 = vshrl.u32 %v589, 7
        %v591 = vsub.s32 0, %v590
        %v592 = vrot.slane %v587, %v591
        %v594 = vadd.f32 %v585, %v592
        %v595 = vadd.f32 %v586, %v592
        %v596 = vmax.f32 %v594, 0.0
        %v597 = vmax.f32 %v595, 0.0
        %598 = vst [vmem:[#allocation3] sm:$0x1] 0.0
        %599 = vst [vmem:[#allocation3 + $0x11] sm:$0x1] 0.0
        %600 = vst [vmem:[#allocation3 + $0x1] sm:$0xff] %v596
        %601 = vst [vmem:[#allocation3 + $0x9] sm:$0xff] %v597
        %v602 = vld [vmem:[#allocation3] sm:$0xff]
        %v603 = vld [vmem:[#allocation3 + $0x8] sm:$0xff]
        %v604 = vpack.c.bf16 %v603, %v602
        %v605 = vld [vmem:[#allocation9] sm:$0xf]
        %v606 = vld [vmem:[#allocation9 + $0x4] sm:$0xf]
        %v607 = vld [vmem:[#allocation9 + $0x8] sm:$0xf]
        %v608 = vld [vmem:[#allocation9 + $0xc] sm:$0xf]
        %v609 = vld [vmem:[#allocation9 + $0x10] sm:$0xf]
        %v610 = vld [vmem:[#allocation9 + $0x14] sm:$0xf]
        %v611 = vld [vmem:[#allocation9 + $0x18] sm:$0xf]
        %v612 = vld [vmem:[#allocation9 + $0x1c] sm:$0xf]
        %v613 = vld [vmem:[#allocation9 + $0x20] sm:$0xf]
        %v614 = vld [vmem:[#allocation9 + $0x24] sm:$0xf]
        %v615 = vld [vmem:[#allocation9 + $0x28] sm:$0xf]
        %v616 = vld [vmem:[#allocation9 + $0x2c] sm:$0xf]
        %v617 = vld [vmem:[#allocation9 + $0x30] sm:$0xf]
        %v618 = vld [vmem:[#allocation9 + $0x34] sm:$0xf]
        %v619 = vld [vmem:[#allocation9 + $0x38] sm:$0xf]
        %v620 = vld [vmem:[#allocation9 + $0x3c] sm:$0xf]
        %v621 = vld [vmem:[#allocation3 + $0x1] sm:$0xff]
        %v622 = vld [vmem:[#allocation3 + $0x9] sm:$0xff]
        %v623 = vpack.c.bf16 %v622, %v621
        %s624 = scalar_lea.vmem [#allocation9], 64
        %v625 = vld [vmem:[%s624] sm:$0xf]
        %v626 = vld [vmem:[%s624 + $0x4] sm:$0xf]
        %v627 = vld [vmem:[%s624 + $0x8] sm:$0xf]
        %v628 = vld [vmem:[%s624 + $0xc] sm:$0xf]
        %v629 = vld [vmem:[%s624 + $0x10] sm:$0xf]
        %v630 = vld [vmem:[%s624 + $0x14] sm:$0xf]
        %v631 = vld [vmem:[%s624 + $0x18] sm:$0xf]
        %v632 = vld [vmem:[%s624 + $0x1c] sm:$0xf]
        %v633 = vld [vmem:[%s624 + $0x20] sm:$0xf]
        %v634 = vld [vmem:[%s624 + $0x24] sm:$0xf]
        %v635 = vld [vmem:[%s624 + $0x28] sm:$0xf]
        %v636 = vld [vmem:[%s624 + $0x2c] sm:$0xf]
        %v637 = vld [vmem:[%s624 + $0x30] sm:$0xf]
        %v638 = vld [vmem:[%s624 + $0x34] sm:$0xf]
        %v639 = vld [vmem:[%s624 + $0x38] sm:$0xf]
        %v640 = vld [vmem:[%s624 + $0x3c] sm:$0xf]
        %v657 = vunpack.c.l.b16 %v625
        %v658 = vunpack.c.l.b16 %v626
        %v659 = vunpack.c.l.b16 %v627
        %v660 = vunpack.c.l.b16 %v628
        %v661 = vunpack.c.l.b16 %v629
        %v662 = vunpack.c.l.b16 %v630
        %v663 = vunpack.c.l.b16 %v631
        %v664 = vunpack.c.l.b16 %v632
        %v665 = vunpack.c.l.b16 %v633
        %v666 = vunpack.c.l.b16 %v634
        %v667 = vunpack.c.l.b16 %v635
        %v668 = vunpack.c.l.b16 %v636
        %v669 = vunpack.c.l.b16 %v637
        %v670 = vunpack.c.l.b16 %v638
        %v671 = vunpack.c.l.b16 %v639
        %v672 = vunpack.c.l.b16 %v640
        %v673 = vpack.c.b16 %v658, %v657
        %v674 = vpack.c.b16 %v660, %v659
        %v675 = vpack.c.b16 %v662, %v661
        %v676 = vpack.c.b16 %v664, %v663
        %v677 = vpack.c.b16 %v666, %v665
        %v678 = vpack.c.b16 %v668, %v667
        %v679 = vpack.c.b16 %v670, %v669
        %v680 = vpack.c.b16 %v672, %v671
        %689 = vmatprep.subr.bf16.mxu0 0
        %690 = vmatpush1.bf16.msra.mxu0 %v673
        %691 = vmatprep.subr.bf16.mxu0 0
        %692 = vmatpush1.bf16.msra.mxu0 %v674
        %693 = vmatprep.subr.bf16.mxu0 0
        %694 = vmatpush1.bf16.msra.mxu0 %v675
        %695 = vmatprep.subr.bf16.mxu0 0
        %696 = vmatpush1.bf16.msra.mxu0 %v676
        %697 = vmatprep.subr.bf16.mxu0 0
        %698 = vmatpush1.bf16.msra.mxu0 %v677
        %699 = vmatprep.subr.bf16.mxu0 0
        %700 = vmatpush1.bf16.msra.mxu0 %v678
        %701 = vmatprep.subr.bf16.mxu0 0
        %702 = vmatpush1.bf16.msra.mxu0 %v679
        %703 = vmatprep.subr.bf16.mxu0 0
        %704 = vmatpush1.bf16.msra.mxu0 %v680
        %705 = vmatprep.subr.bf16.mxu0 0
        %706 = vmatpush1.bf16.msra.mxu0 0
        %707 = vmatprep.subr.bf16.mxu0 0
        %708 = vmatpush1.bf16.msra.mxu0 0
        %709 = vmatprep.subr.bf16.mxu0 0
        %710 = vmatpush1.bf16.msra.mxu0 0
        %711 = vmatprep.subr.bf16.mxu0 0
        %712 = vmatpush1.bf16.msra.mxu0 0
        %713 = vmatprep.subr.bf16.mxu0 0
        %714 = vmatpush1.bf16.msra.mxu0 0
        %715 = vmatprep.subr.bf16.mxu0 0
        %716 = vmatpush1.bf16.msra.mxu0 0
        %717 = vmatprep.subr.bf16.mxu0 0
        %718 = vmatpush1.bf16.msra.mxu0 0
        %719 = vmatprep.subr.bf16.mxu0 0
        %720 = vmatpush1.bf16.msra.mxu0 0
        %721 = vmatprep.mubr.bf16.mxu0 0
        %722 = vmatmul.mubr.bf16.gmra.mrb[0].mxu0 %v623
        %v723 = vpop.f32.mrb[0].mxu0
        %v724 = vadd.f32 0.0, %v723
        %v725 = vpop.f32.mrb[0].mxu0
        %v726 = vpop.f32.mrb[0].mxu0
        %v727 = vadd.f32 0.0, %v726
        %v728 = vpop.f32.mrb[0].mxu0
        %729 = vdwg.mxu0
        %v746 = vunpack.c.l.b16 %v605
        %v747 = vunpack.c.l.b16 %v606
        %v748 = vunpack.c.l.b16 %v607
        %v749 = vunpack.c.l.b16 %v608
        %v750 = vunpack.c.l.b16 %v609
        %v751 = vunpack.c.l.b16 %v610
        %v752 = vunpack.c.l.b16 %v611
        %v753 = vunpack.c.l.b16 %v612
        %v754 = vunpack.c.l.b16 %v613
        %v755 = vunpack.c.l.b16 %v614
        %v756 = vunpack.c.l.b16 %v615
        %v757 = vunpack.c.l.b16 %v616
        %v758 = vunpack.c.l.b16 %v617
        %v759 = vunpack.c.l.b16 %v618
        %v760 = vunpack.c.l.b16 %v619
        %v761 = vunpack.c.l.b16 %v620
        %v762 = vpack.c.b16 %v747, %v746
        %v763 = vpack.c.b16 %v749, %v748
        %v764 = vpack.c.b16 %v751, %v750
        %v765 = vpack.c.b16 %v753, %v752
        %v766 = vpack.c.b16 %v755, %v754
        %v767 = vpack.c.b16 %v757, %v756
        %v768 = vpack.c.b16 %v759, %v758
        %v769 = vpack.c.b16 %v761, %v760
        %778 = vmatprep.subr.bf16.mxu0 0
        %779 = vmatpush1.bf16.msra.mxu0 %v762
        %780 = vmatprep.subr.bf16.mxu0 0
        %781 = vmatpush1.bf16.msra.mxu0 %v763
        %782 = vmatprep.subr.bf16.mxu0 0
        %783 = vmatpush1.bf16.msra.mxu0 %v764
        %784 = vmatprep.subr.bf16.mxu0 0
        %785 = vmatpush1.bf16.msra.mxu0 %v765
        %786 = vmatprep.subr.bf16.mxu0 0
        %787 = vmatpush1.bf16.msra.mxu0 %v766
        %788 = vmatprep.subr.bf16.mxu0 0
        %789 = vmatpush1.bf16.msra.mxu0 %v767
        %790 = vmatprep.subr.bf16.mxu0 0
        %791 = vmatpush1.bf16.msra.mxu0 %v768
        %792 = vmatprep.subr.bf16.mxu0 0
        %793 = vmatpush1.bf16.msra.mxu0 %v769
        %794 = vmatprep.subr.bf16.mxu0 0
        %795 = vmatpush1.bf16.msra.mxu0 0
        %796 = vmatprep.subr.bf16.mxu0 0
        %797 = vmatpush1.bf16.msra.mxu0 0
        %798 = vmatprep.subr.bf16.mxu0 0
        %799 = vmatpush1.bf16.msra.mxu0 0
        %800 = vmatprep.subr.bf16.mxu0 0
        %801 = vmatpush1.bf16.msra.mxu0 0
        %802 = vmatprep.subr.bf16.mxu0 0
        %803 = vmatpush1.bf16.msra.mxu0 0
        %804 = vmatprep.subr.bf16.mxu0 0
        %805 = vmatpush1.bf16.msra.mxu0 0
        %806 = vmatprep.subr.bf16.mxu0 0
        %807 = vmatpush1.bf16.msra.mxu0 0
        %808 = vmatprep.subr.bf16.mxu0 0
        %809 = vmatpush1.bf16.msra.mxu0 0
        %810 = vmatprep.mubr.bf16.mxu0 0
        %811 = vmatmul.mubr.bf16.gmra.mrb[0].mxu0 %v604
        %v812 = vpop.f32.mrb[0].mxu0
        %v813 = vadd.f32 %v724, %v812
        %v814 = vpop.f32.mrb[0].mxu0
        %v815 = vpop.f32.mrb[0].mxu0
        %v816 = vadd.f32 %v727, %v815
        %v817 = vpop.f32.mrb[0].mxu0
        %818 = vdwg.mxu0
        %v819 = vld [vmem:[#allocation3 + $0x2] sm:$0xff]
        %v820 = vld [vmem:[#allocation3 + $0xa] sm:$0xff]
        %v821 = vpack.c.bf16 %v820, %v819
        %s822 = scalar_lea.vmem [#allocation9], 128
        %v823 = vld [vmem:[%s822] sm:$0xf]
        %v824 = vld [vmem:[%s822 + $0x4] sm:$0xf]
        %v825 = vld [vmem:[%s822 + $0x8] sm:$0xf]
        %v826 = vld [vmem:[%s822 + $0xc] sm:$0xf]
        %v827 = vld [vmem:[%s822 + $0x10] sm:$0xf]
        %v828 = vld [vmem:[%s822 + $0x14] sm:$0xf]
        %v829 = vld [vmem:[%s822 + $0x18] sm:$0xf]
        %v830 = vld [vmem:[%s822 + $0x1c] sm:$0xf]
        %v831 = vld [vmem:[%s822 + $0x20] sm:$0xf]
        %v832 = vld [vmem:[%s822 + $0x24] sm:$0xf]
        %v833 = vld [vmem:[%s822 + $0x28] sm:$0xf]
        %v834 = vld [vmem:[%s822 + $0x2c] sm:$0xf]
        %v835 = vld [vmem:[%s822 + $0x30] sm:$0xf]
        %v836 = vld [vmem:[%s822 + $0x34] sm:$0xf]
        %v837 = vld [vmem:[%s822 + $0x38] sm:$0xf]
        %v838 = vld [vmem:[%s822 + $0x3c] sm:$0xf]
        %v855 = vunpack.c.l.b16 %v823
        %v856 = vunpack.c.l.b16 %v824
        %v857 = vunpack.c.l.b16 %v825
        %v858 = vunpack.c.l.b16 %v826
        %v859 = vunpack.c.l.b16 %v827
        %v860 = vunpack.c.l.b16 %v828
        %v861 = vunpack.c.l.b16 %v829
        %v862 = vunpack.c.l.b16 %v830
        %v863 = vunpack.c.l.b16 %v831
        %v864 = vunpack.c.l.b16 %v832
        %v865 = vunpack.c.l.b16 %v833
        %v866 = vunpack.c.l.b16 %v834
        %v867 = vunpack.c.l.b16 %v835
        %v868 = vunpack.c.l.b16 %v836
        %v869 = vunpack.c.l.b16 %v837
        %v870 = vunpack.c.l.b16 %v838
        %v871 = vpack.c.b16 %v856, %v855
        %v872 = vpack.c.b16 %v858, %v857
        %v873 = vpack.c.b16 %v860, %v859
        %v874 = vpack.c.b16 %v862, %v861
        %v875 = vpack.c.b16 %v864, %v863
        %v876 = vpack.c.b16 %v866, %v865
        %v877 = vpack.c.b16 %v868, %v867
        %v878 = vpack.c.b16 %v870, %v869
        %887 = vmatprep.subr.bf16.mxu0 0
        %888 = vmatpush1.bf16.msra.mxu0 %v871
        %889 = vmatprep.subr.bf16.mxu0 0
        %890 = vmatpush1.bf16.msra.mxu0 %v872
        %891 = vmatprep.subr.bf16.mxu0 0
        %892 = vmatpush1.bf16.msra.mxu0 %v873
        %893 = vmatprep.subr.bf16.mxu0 0
        %894 = vmatpush1.bf16.msra.mxu0 %v874
        %895 = vmatprep.subr.bf16.mxu0 0
        %896 = vmatpush1.bf16.msra.mxu0 %v875
        %897 = vmatprep.subr.bf16.mxu0 0
        %898 = vmatpush1.bf16.msra.mxu0 %v876
        %899 = vmatprep.subr.bf16.mxu0 0
        %900 = vmatpush1.bf16.msra.mxu0 %v877
        %901 = vmatprep.subr.bf16.mxu0 0
        %902 = vmatpush1.bf16.msra.mxu0 %v878
        %903 = vmatprep.subr.bf16.mxu0 0
        %904 = vmatpush1.bf16.msra.mxu0 0
        %905 = vmatprep.subr.bf16.mxu0 0
        %906 = vmatpush1.bf16.msra.mxu0 0
        %907 = vmatprep.subr.bf16.mxu0 0
        %908 = vmatpush1.bf16.msra.mxu0 0
        %909 = vmatprep.subr.bf16.mxu0 0
        %910 = vmatpush1.bf16.msra.mxu0 0
        %911 = vmatprep.subr.bf16.mxu0 0
        %912 = vmatpush1.bf16.msra.mxu0 0
        %913 = vmatprep.subr.bf16.mxu0 0
        %914 = vmatpush1.bf16.msra.mxu0 0
        %915 = vmatprep.subr.bf16.mxu0 0
        %916 = vmatpush1.bf16.msra.mxu0 0
        %917 = vmatprep.subr.bf16.mxu0 0
        %918 = vmatpush1.bf16.msra.mxu0 0
        %919 = vmatprep.mubr.bf16.mxu0 0
        %920 = vmatmul.mubr.bf16.gmra.mrb[0].mxu0 %v821
        %v921 = vpop.f32.mrb[0].mxu0
        %v922 = vadd.f32 0.0, %v921
        %v923 = vpop.f32.mrb[0].mxu0
        %v924 = vpop.f32.mrb[0].mxu0
        %v925 = vadd.f32 0.0, %v924
        %v926 = vpop.f32.mrb[0].mxu0
        %927 = vdwg.mxu0
        %v928 = vadd.f32 %v813, %v922
        %v929 = vadd.f32 %v816, %v925
        %v930 = vld [vmem:[%s5] sm:$0x1]
        %v932 = vlaneseq
        %v933 = vshrl.u32 %v932, 7
        %v934 = vsub.s32 0, %v933
        %v935 = vrot.slane %v930, %v934
        %v937 = vmul.f32 %v928, %v935
        %v938 = vmul.f32 %v929, %v935
        %v939 = vld [vmem:[%s6] sm:$0x1]
        %v941 = vlaneseq
        %v942 = vshrl.u32 %v941, 7
        %v943 = vsub.s32 0, %v942
        %v944 = vrot.slane %v939, %v943
        %v946 = vadd.f32 %v937, %v944
        %v947 = vadd.f32 %v938, %v944
        %v948 = vmax.f32 %v946, 0.0
        %v949 = vmax.f32 %v947, 0.0
        %950 = vst [vmem:[%s325] sm:$0xff] %v948
        %951 = vst [vmem:[%s325 + $0x8] sm:$0xff] %v949
        %s952 = sand.u32 %s185, 1
        %s953 = scalar_lea.sflag [#allocation6], %s952
        %s954 = sand.u32 %s185, 1
        %s955 = smul.addr %s954, 16
        %s956 = scalar_lea.vmem [#allocation10], %s955
        // Predicated region
        $region61: #{tpu_custom_call.1} parent=47 // pred_check
          %p957 = pneg %p195
        $region62: #{tpu_custom_call.1} parent=47 // pred_check_branch
          %959 = sbr.rel (%p957) target = $region64
        $region63: #{tpu_custom_call.1} parent=47 // pred_region
          %s961 = ssub.s32 256, 256
          %962 = vsyncadd %s953, %s961
          %s963 = smul.addr %s25, 2
          %s964 = smul.addr %s963, 128
          %s965 = scalar_lea.hbm %s7, %s964
          %s966 = sshll.u32 %s956, 4
          %s967 = int_to_ptr.vmem [resolvable:$true] %s966
          %972 = dma.vmem_to_hbm [thread:$0]  %s967, 256, %s965, %s953, 128, 128, 8
        $region64: #{tpu_custom_call.1} parent=47 // pred_fallthru
          _
      $region48: #{tpu_custom_call.1} parent=5 // pred_fallthru
        _
      %p973 = scmp.le.s32.totalorder 2, %s20
      // Predicated region
      $region65: #{tpu_custom_call.1} parent=5 // pred_check
        %p974 = pneg %p973
      $region66: #{tpu_custom_call.1} parent=5 // pred_check_branch
        %976 = sbr.rel (%p974) target = $region68
      $region67: #{tpu_custom_call.1} parent=5 // pred_region
        %s977 = ssub.s32 %s20, 2
        // Predicated region
        $region69: #{tpu_custom_call.1} parent=67 // pred_check
          %p978 = pneg %p201
        $region70: #{tpu_custom_call.1} parent=67 // pred_check_branch
          %980 = sbr.rel (%p978) target = $region72
        $region71: #{tpu_custom_call.1} parent=67 // pred_region
          %s981 = sand.u32 %s186, 1
          %s982 = scalar_lea.sflag [#allocation6], %s981
          %s983 = sand.u32 %s186, 1
          %s984 = smul.addr %s983, 16
          %s985 = scalar_lea.vmem [#allocation10], %s984
          %986 = dma.done %s982, 256
        $region72: #{tpu_custom_call.1} parent=67 // pred_fallthru
          _
      $region68: #{tpu_custom_call.1} parent=5 // pred_fallthru
        _
    $region6: #{tpu_custom_call.1} parent=1 // loop_footer
      %s24 = sadd.s32 1, %s20
    $region7: #{tpu_custom_call.1} parent=1 // loop_footer_branch
      %19 = sbr.rel target = $region3
    $region8: #{tpu_custom_call.1} parent=1 // loop_exit
      _
    %987 = vsyncpa [#allocation5], 1
    %s988 = scalar_lea.sflag [#allocation5], 1
    %989 = vsyncpa %s988, 1
    %990 = vsyncpa [#allocation8], 1
    %991 = vsyncpa [#allocation6], 1
    %s992 = scalar_lea.sflag [#allocation6], 1
    %993 = vsyncpa %s992, 1

</llo_original>
